<compile_context>
chip_gen: v7x
topology: tpu7x:2x2x1
jax: 0.10.0
libtpu: 0.0.40
codegen_flags: <defaults>
</compile_context>

<pallas_src>
import functools

import jax
import jax.numpy as jnp
from jax.experimental import pallas as pl
from jax.experimental.pallas import tpu as pltpu


def _mha_kernel(x_ref, w_ref, o_ref, *, batch):
    # x_ref: (B, L, Din)   all batch elements resident in VMEM
    # w_ref: (Din, Din)    combined (Wq * w_rep * scale) @ Wk^T
    # o_ref: (B, L, L)
    w = w_ref[...]
    # B is tiny & static -> unrolled Python loop; each iteration is two clean
    # 2-D MXU matmuls (the batched einsum would lower to the same per-batch
    # MXU pushes anyway).
    for b in range(batch):
        xb = x_ref[b]                                                # (L, Din)
        tmp = jnp.dot(xb, w, preferred_element_type=jnp.float32)     # (L, Din)
        # tmp @ xb^T without materializing a transpose:
        scores = jax.lax.dot_general(
            tmp, xb,
            dimension_numbers=(((1,), (1,)), ((), ())),
            preferred_element_type=jnp.float32)                      # (L, L)
        o_ref[b] = scores.astype(o_ref.dtype)


def multi_head_attention(inputs, wq, wk, wh, *, input_dim, hidden_dim,
                         num_heads, seq_len2):
    """inputs: (B, L, input_dim + seq_len2); wq/wk: (Din, H*input_dim); wh: (1, H)."""
    B, L, Din = inputs.shape
    assert Din == input_dim + seq_len2
    scale = 1.0 / float((hidden_dim + seq_len2) ** 0.5)

    # Fold the head-mixing weights + scale into the Q projection, then fold the
    # K projection:  sum_h wh[h]*Qh@Kh^T == x @ (Wq*diag(w_rep)*scale @ Wk^T) @ x^T
    w_rep = jnp.repeat(wh[0].astype(jnp.float32), input_dim)         # (H*Di,)
    wq_scaled = wq.astype(jnp.float32) * (w_rep * scale)[None, :]    # (Din, H*Di)
    w_combined = wq_scaled @ wk.astype(jnp.float32).T                # (Din, Din)

    kernel = functools.partial(_mha_kernel, batch=B)

    # Single grid step: the whole problem fits VMEM trivially, so there is no
    # reason to pay per-step pipeline overhead by iterating over B.
    return pl.pallas_call(
        kernel,
        out_shape=jax.ShapeDtypeStruct((B, L, L), jnp.float32),
        grid=(1,),
        in_specs=[
            pl.BlockSpec((B, L, Din), lambda i: (0, 0, 0)),   # x (all batches)
            pl.BlockSpec((Din, Din), lambda i: (0, 0)),       # combined weight
        ],
        out_specs=pl.BlockSpec((B, L, L), lambda i: (0, 0, 0)),
        compiler_params=pltpu.CompilerParams(
            dimension_semantics=("arbitrary",)),
    )(inputs, w_combined)


def _reference(inputs, wq, wk, wh, *, input_dim, hidden_dim, num_heads, seq_len2):
    # Pure-JAX mirror of the PyTorch forward (head-wise, un-fused) for checking.
    q = inputs @ wq                                  # (B, L, H*Di)
    k = inputs @ wk
    q = jnp.stack(jnp.split(q, num_heads, axis=2), axis=0)   # (H, B, L, Di)
    k = jnp.stack(jnp.split(k, num_heads, axis=2), axis=0)
    scores = jnp.einsum('hbld,hbmd->hblm', q, k)
    scores = scores / ((hidden_dim + seq_len2) ** 0.5)
    scores = jnp.transpose(scores, (1, 2, 3, 0))             # (B, L, L, H)
    out = jnp.einsum('blmh,h->blm', scores, wh[0])
    return out


if __name__ == "__main__":
    # Module hyper-params (small, consistent with the forward pass).
    input_dim = 4
    hidden_dim = 32
    num_heads = 2
    seq_len2 = 8
    batch = 2
    seq_len = 16
    d_in = input_dim + seq_len2

    key = jax.random.PRNGKey(0)
    k_x, k_wq, k_wk, k_wh = jax.random.split(key, 4)

    x = jax.random.normal(k_x, (batch, seq_len, d_in), dtype=jnp.float32)
    # nn.Linear(in, out, bias=False) applies x @ W^T; we store weights already
    # transposed as (in, out), initialized deterministically (synthetic).
    wq = jax.random.normal(k_wq, (d_in, input_dim * num_heads), jnp.float32) * 0.1
    wk = jax.random.normal(k_wk, (d_in, input_dim * num_heads), jnp.float32) * 0.1
    wh = jax.random.normal(k_wh, (1, num_heads), jnp.float32) * 0.1

    out = multi_head_attention(x, wq, wk, wh, input_dim=input_dim,
                               hidden_dim=hidden_dim, num_heads=num_heads,
                               seq_len2=seq_len2)
    out = jax.block_until_ready(out)

    ref = _reference(x, wq, wk, wh, input_dim=input_dim, hidden_dim=hidden_dim,
                     num_heads=num_heads, seq_len2=seq_len2)
    assert out.shape == (batch, seq_len, seq_len)
    assert jnp.allclose(out, ref, atol=1e-5, rtol=1e-5)

    print("KERNEL_OK")
</pallas_src>

<mosaic_0001>
module attributes {stable_mosaic.version = 11 : i64} {
  func.func @_mha_kernel(%arg0: i32, %arg1: memref<2x16x12xf32, #tpu.memory_space<vmem>>, %arg2: memref<12x12xf32, #tpu.memory_space<vmem>>, %arg3: memref<2x16x16xf32, #tpu.memory_space<vmem>>) attributes {dimension_semantics = [#tpu.dimension_semantics<arbitrary>], iteration_bounds = array<i64: 1>, scalar_prefetch = 0 : i64, scratch_operands = 0 : i64, tpu.core_type = #tpu.core_type<tc>, window_params = [{pipeline_mode = #tpu.pipeline_mode<synchronous>, transform_indices = @transform_0, window_bounds = array<i64: 2, 16, 12>}, {pipeline_mode = #tpu.pipeline_mode<synchronous>, transform_indices = @transform_1, window_bounds = array<i64: 12, 12>}, {pipeline_mode = #tpu.pipeline_mode<synchronous>, transform_indices = @transform_2, window_bounds = array<i64: 2, 16, 16>}]} {
    %c0 = arith.constant 0 : index
    %c0_0 = arith.constant 0 : index
    %0 = vector.load %arg2[%c0, %c0_0] : memref<12x12xf32, #tpu.memory_space<vmem>>, vector<12x12xf32>
    %c0_1 = arith.constant 0 : index
    %c0_2 = arith.constant 0 : index
    %c0_3 = arith.constant 0 : index
    %1 = vector.load %arg1[%c0_1, %c0_2, %c0_3] : memref<2x16x12xf32, #tpu.memory_space<vmem>>, vector<1x16x12xf32>
    %2 = vector.shape_cast %1 : vector<1x16x12xf32> to vector<16x12xf32>
    %cst = arith.constant dense<0.000000e+00> : vector<16x12xf32>
    %3 = tpu.matmul %2, %0, %cst {dimension_numbers = #tpu.dot_dimension_numbers<[1], [0], [0], [1], [0, 0, 1, 1], [], []>} : vector<16x12xf32>, vector<12x12xf32>, vector<16x12xf32> -> vector<16x12xf32>
    %cst_4 = arith.constant dense<0.000000e+00> : vector<16x16xf32>
    %4 = tpu.matmul %3, %2, %cst_4 {dimension_numbers = #tpu.dot_dimension_numbers<[1], [1], [0], [0], [0, 0, 1, 0], [], []>} : vector<16x12xf32>, vector<16x12xf32>, vector<16x16xf32> -> vector<16x16xf32>
    %c0_5 = arith.constant 0 : index
    %c0_6 = arith.constant 0 : index
    %c0_7 = arith.constant 0 : index
    %5 = vector.load %arg3[%c0_5, %c0_6, %c0_7] : memref<2x16x16xf32, #tpu.memory_space<vmem>>, vector<1x16x16xf32>
    %6 = vector.shape_cast %5 : vector<1x16x16xf32> to vector<16x16xf32>
    %7 = vector.shape_cast %4 : vector<16x16xf32> to vector<1x16x16xf32>
    tpu.vector_store %arg3[%c0_5, %c0_6, %c0_7], %7 {strides = array<i32>} : memref<2x16x16xf32, #tpu.memory_space<vmem>>, vector<1x16x16xf32>,
    %c1 = arith.constant 1 : index
    %c0_8 = arith.constant 0 : index
    %c0_9 = arith.constant 0 : index
    %8 = vector.load %arg1[%c1, %c0_8, %c0_9] : memref<2x16x12xf32, #tpu.memory_space<vmem>>, vector<1x16x12xf32>
    %9 = vector.shape_cast %8 : vector<1x16x12xf32> to vector<16x12xf32>
    %cst_10 = arith.constant dense<0.000000e+00> : vector<16x12xf32>
    %10 = tpu.matmul %9, %0, %cst_10 {dimension_numbers = #tpu.dot_dimension_numbers<[1], [0], [0], [1], [0, 0, 1, 1], [], []>} : vector<16x12xf32>, vector<12x12xf32>, vector<16x12xf32> -> vector<16x12xf32>
    %cst_11 = arith.constant dense<0.000000e+00> : vector<16x16xf32>
    %11 = tpu.matmul %10, %9, %cst_11 {dimension_numbers = #tpu.dot_dimension_numbers<[1], [1], [0], [0], [0, 0, 1, 0], [], []>} : vector<16x12xf32>, vector<16x12xf32>, vector<16x16xf32> -> vector<16x16xf32>
    %c1_12 = arith.constant 1 : index
    %c0_13 = arith.constant 0 : index
    %c0_14 = arith.constant 0 : index
    %12 = vector.load %arg3[%c1_12, %c0_13, %c0_14] : memref<2x16x16xf32, #tpu.memory_space<vmem>>, vector<1x16x16xf32>
    %13 = vector.shape_cast %12 : vector<1x16x16xf32> to vector<16x16xf32>
    %14 = vector.shape_cast %11 : vector<16x16xf32> to vector<1x16x16xf32>
    tpu.vector_store %arg3[%c1_12, %c0_13, %c0_14], %14 {strides = array<i32>} : memref<2x16x16xf32, #tpu.memory_space<vmem>>, vector<1x16x16xf32>,
    return
  }
  func.func @transform_0(%arg0: i32) -> (i32, i32, i32) {
    %c0_i32 = arith.constant 0 : i32
    %c0_i32_0 = arith.constant 0 : i32
    %c0_i32_1 = arith.constant 0 : i32
    %c0_i32_2 = arith.constant 0 : i32
    return %c0_i32, %c0_i32_0, %c0_i32_1 : i32, i32, i32
  }
  func.func @transform_1(%arg0: i32) -> (i32, i32) {
    %c0_i32 = arith.constant 0 : i32
    %c0_i32_0 = arith.constant 0 : i32
    %c0_i32_1 = arith.constant 0 : i32
    return %c0_i32, %c0_i32_0 : i32, i32
  }
  func.func @transform_2(%arg0: i32) -> (i32, i32, i32) {
    %c0_i32 = arith.constant 0 : i32
    %c0_i32_0 = arith.constant 0 : i32
    %c0_i32_1 = arith.constant 0 : i32
    %c0_i32_2 = arith.constant 0 : i32
    return %c0_i32, %c0_i32_0, %c0_i32_1 : i32, i32, i32
  }
}

</mosaic_0001>

<llo_original>
// kernel: tpu_custom_call.1
$region0: #{tpu_custom_call.1}
  #allocation0 [shape = 'u32[]', space=smem, size = 0x4, offset = 0x4, fixed_abs, tag = 'smem constant byte address 0x4 - core index']
  #allocation1 [shape = 'u32[144,128]{1,0:T(1,128)}', space=vmem, size = 0x12000, scoped, tag = 'internal scratch']
  %s0 = inlined_call_operand.vmem [shape: f32[2,16,12], index: 0, kind: input, shape index: {}]
  %s1 = inlined_call_operand.vmem [shape: f32[12,12], index: 1, kind: input, shape index: {}]
  %s2 = inlined_call_operand.hbm [shape: f32[2,16,16], index: 2, kind: output, shape index: {}]
  %s3 = sld [smem:[#allocation0]]
  $region18: #{tpu_custom_call.1} parent=0
    _
  %s5 = ssub.s32 1, %s3
  %s6 = scalar_select 0, %s5, %s3
  $region1: #{tpu_custom_call.1} parent=0
    #allocation2 [shape = 'u8[16384]{0}', space=vmem, size = 0x4000, scoped, tag = 'output window, operand 0, single buffered']
    #allocation3 [shape = 's32[1]{0}', space=sflag, size = 0x4, scoped, tag = 'scoped memory for tpu_custom_call.1']
    %7 = vsyncpa [#allocation3], 0
    // Predicated region
    $region2: #{tpu_custom_call.1} parent=1 // pred_check
      _
    $region3: #{tpu_custom_call.1} parent=1 // pred_check_branch
      %9 = sbr.rel (0) target = $region5
    $region4: #{tpu_custom_call.1} parent=1 // pred_region
      _
    $region5: #{tpu_custom_call.1} parent=1 // pred_fallthru
      _
    // Predicated region
    $region6: #{tpu_custom_call.1} parent=1 // pred_check
      _
    $region7: #{tpu_custom_call.1} parent=1 // pred_check_branch
      %11 = sbr.rel (0) target = $region9
    $region8: #{tpu_custom_call.1} parent=1 // pred_region
      _
    $region9: #{tpu_custom_call.1} parent=1 // pred_fallthru
      _
    %v12 = vld [vmem:[%s1] sm:$0xff]
    %v13 = vld [vmem:[%s1 + $0x8] sm:$0xf]
    %v14 = vld [vmem:[%s0] sm:$0xff]
    %v15 = vld [vmem:[%s0 + $0x8] sm:$0xff]
    %vm16 = vcmask 97280
    %v18 = vsel %vm16, %v14, 0
    %v21 = vsel %vm16, %v15, 0
    %vm23 = vcmask 1043456
    %v25 = vsel %vm23, %v13, 0
    %27 = vmatprep.subr.mxu0 0.0
    %28 = vmatpush1.msra.mxu0 %v12
    %29 = vmatprep.subr.mxu0 0.0
    %30 = vmatpush1.msra.mxu0 %v25
    %31 = vmatprep.subr.mxu0 0.0
    %32 = vmatpush1.msra.mxu0 0.0
    %33 = vmatprep.subr.mxu0 0.0
    %34 = vmatpush1.msra.mxu0 0.0
    %35 = vmatprep.subr.mxu0 0.0
    %36 = vmatpush1.msra.mxu0 0.0
    %37 = vmatprep.subr.mxu0 0.0
    %38 = vmatpush1.msra.mxu0 0.0
    %39 = vmatprep.subr.mxu0 0.0
    %40 = vmatpush1.msra.mxu0 0.0
    %41 = vmatprep.subr.mxu0 0.0
    %42 = vmatpush1.msra.mxu0 0.0
    %43 = vmatprep.subr.mxu0 0.0
    %44 = vmatpush1.msra.mxu0 0.0
    %45 = vmatprep.subr.mxu0 0.0
    %46 = vmatpush1.msra.mxu0 0.0
    %47 = vmatprep.subr.mxu0 0.0
    %48 = vmatpush1.msra.mxu0 0.0
    %49 = vmatprep.subr.mxu0 0.0
    %50 = vmatpush1.msra.mxu0 0.0
    %51 = vmatprep.subr.mxu0 0.0
    %52 = vmatpush1.msra.mxu0 0.0
    %53 = vmatprep.subr.mxu0 0.0
    %54 = vmatpush1.msra.mxu0 0.0
    %55 = vmatprep.subr.mxu0 0.0
    %56 = vmatpush1.msra.mxu0 0.0
    %57 = vmatprep.subr.mxu0 0.0
    %58 = vmatpush1.msra.mxu0 0.0
    %59 = vmatprep.subr.mxu0 0.0
    %60 = vmatpush1.msra.mxu0 0.0
    %61 = vmatprep.subr.mxu0 0.0
    %62 = vmatpush1.msra.mxu0 0.0
    %63 = vmatprep.subr.mxu0 0.0
    %64 = vmatpush1.msra.mxu0 0.0
    %65 = vmatprep.subr.mxu0 0.0
    %66 = vmatpush1.msra.mxu0 0.0
    %67 = vmatprep.subr.mxu0 0.0
    %68 = vmatpush1.msra.mxu0 0.0
    %69 = vmatprep.subr.mxu0 0.0
    %70 = vmatpush1.msra.mxu0 0.0
    %71 = vmatprep.subr.mxu0 0.0
    %72 = vmatpush1.msra.mxu0 0.0
    %73 = vmatprep.subr.mxu0 0.0
    %74 = vmatpush1.msra.mxu0 0.0
    %75 = vmatprep.subr.mxu0 0.0
    %76 = vmatpush1.msra.mxu0 0.0
    %77 = vmatprep.subr.mxu0 0.0
    %78 = vmatpush1.msra.mxu0 0.0
    %79 = vmatprep.subr.mxu0 0.0
    %80 = vmatpush1.msra.mxu0 0.0
    %81 = vmatprep.subr.mxu0 0.0
    %82 = vmatpush1.msra.mxu0 0.0
    %83 = vmatprep.subr.mxu0 0.0
    %84 = vmatpush1.msra.mxu0 0.0
    %85 = vmatprep.subr.mxu0 0.0
    %86 = vmatpush1.msra.mxu0 0.0
    %87 = vmatprep.subr.mxu0 0.0
    %88 = vmatpush1.msra.mxu0 0.0
    %89 = vmatprep.subr.mxu0 0.0
    %90 = vmatpush1.msra.mxu0 0.0
    %91 = vmatprep.mubr.f32.mxu0 0.0
    %92 = vmatmul.mubr.f32.gmra.mrb[0].mxu0 %v18
    %v93 = vpop.f32.mrb[0].mxu0
    %v94 = vadd.f32 0.0, %v93
    %v95 = vpop.f32.mrb[0].mxu0
    %96 = vmatprep.mubr.f32.mxu0 0.0
    %97 = vmatmul.mubr.f32.gmra.mrb[0].mxu0 %v21
    %v98 = vpop.f32.mrb[0].mxu0
    %v99 = vadd.f32 0.0, %v98
    %v100 = vpop.f32.mrb[0].mxu0
    %101 = vdwg.mxu0
    %v103 = vsel %vm16, %v94, 0
    %v106 = vsel %vm16, %v99, 0
    %108 = vmatprep.subr.mxu0 0.0
    %109 = vmatpush1.xpose.msra.mxu0 %v18
    %110 = vmatprep.subr.mxu0 0.0
    %111 = vmatpush1.xpose.msra.mxu0 %v21
    %112 = vmatprep.subr.mxu0 0.0
    %113 = vmatpush1.xpose.msra.mxu0 0.0
    %114 = vmatprep.subr.mxu0 0.0
    %115 = vmatpush1.xpose.msra.mxu0 0.0
    %116 = vmatprep.subr.mxu0 0.0
    %117 = vmatpush1.xpose.msra.mxu0 0.0
    %118 = vmatprep.subr.mxu0 0.0
    %119 = vmatpush1.xpose.msra.mxu0 0.0
    %120 = vmatprep.subr.mxu0 0.0
    %121 = vmatpush1.xpose.msra.mxu0 0.0
    %122 = vmatprep.subr.mxu0 0.0
    %123 = vmatpush1.xpose.msra.mxu0 0.0
    %124 = vmatprep.subr.mxu0 0.0
    %125 = vmatpush1.xpose.msra.mxu0 0.0
    %126 = vmatprep.subr.mxu0 0.0
    %127 = vmatpush1.xpose.msra.mxu0 0.0
    %128 = vmatprep.subr.mxu0 0.0
    %129 = vmatpush1.xpose.msra.mxu0 0.0
    %130 = vmatprep.subr.mxu0 0.0
    %131 = vmatpush1.xpose.msra.mxu0 0.0
    %132 = vmatprep.subr.mxu0 0.0
    %133 = vmatpush1.xpose.msra.mxu0 0.0
    %134 = vmatprep.subr.mxu0 0.0
    %135 = vmatpush1.xpose.msra.mxu0 0.0
    %136 = vmatprep.subr.mxu0 0.0
    %137 = vmatpush1.xpose.msra.mxu0 0.0
    %138 = vmatprep.subr.mxu0 0.0
    %139 = vmatpush1.xpose.msra.mxu0 0.0
    %140 = vmatprep.subr.mxu0 0.0
    %141 = vmatpush1.xpose.msra.mxu0 0.0
    %142 = vmatprep.subr.mxu0 0.0
    %143 = vmatpush1.xpose.msra.mxu0 0.0
    %144 = vmatprep.subr.mxu0 0.0
    %145 = vmatpush1.xpose.msra.mxu0 0.0
    %146 = vmatprep.subr.mxu0 0.0
    %147 = vmatpush1.xpose.msra.mxu0 0.0
    %148 = vmatprep.subr.mxu0 0.0
    %149 = vmatpush1.xpose.msra.mxu0 0.0
    %150 = vmatprep.subr.mxu0 0.0
    %151 = vmatpush1.xpose.msra.mxu0 0.0
    %152 = vmatprep.subr.mxu0 0.0
    %153 = vmatpush1.xpose.msra.mxu0 0.0
    %154 = vmatprep.subr.mxu0 0.0
    %155 = vmatpush1.xpose.msra.mxu0 0.0
    %156 = vmatprep.subr.mxu0 0.0
    %157 = vmatpush1.xpose.msra.mxu0 0.0
    %158 = vmatprep.subr.mxu0 0.0
    %159 = vmatpush1.xpose.msra.mxu0 0.0
    %160 = vmatprep.subr.mxu0 0.0
    %161 = vmatpush1.xpose.msra.mxu0 0.0
    %162 = vmatprep.subr.mxu0 0.0
    %163 = vmatpush1.xpose.msra.mxu0 0.0
    %164 = vmatprep.subr.mxu0 0.0
    %165 = vmatpush1.xpose.msra.mxu0 0.0
    %166 = vmatprep.subr.mxu0 0.0
    %167 = vmatpush1.xpose.msra.mxu0 0.0
    %168 = vmatprep.subr.mxu0 0.0
    %169 = vmatpush1.xpose.msra.mxu0 0.0
    %170 = vmatprep.subr.mxu0 0.0
    %171 = vmatpush1.xpose.msra.mxu0 0.0
    %172 = vmatprep.mubr.f32.mxu0 0.0
    %173 = vmatmul.mubr.f32.gmra.mrb[0].mxu0 %v103
    %v174 = vpop.f32.mrb[0].mxu0
    %v175 = vadd.f32 0.0, %v174
    %v176 = vpop.f32.mrb[0].mxu0
    %177 = vmatprep.mubr.f32.mxu0 0.0
    %178 = vmatmul.mubr.f32.gmra.mrb[0].mxu0 %v106
    %v179 = vpop.f32.mrb[0].mxu0
    %v180 = vadd.f32 0.0, %v179
    %v181 = vpop.f32.mrb[0].mxu0
    %182 = vdwg.mxu0
    %vm183 = vcmask 130048
    %184 = vst.msk [vmem:[#allocation2] sm:$0xff] %vm183, %v175
    %185 = vst.msk [vmem:[#allocation2 + $0x8] sm:$0xff] %vm183, %v180
    %s186 = scalar_lea.vmem %s0, 16
    %v187 = vld [vmem:[%s186] sm:$0xff]
    %v188 = vld [vmem:[%s186 + $0x8] sm:$0xff]
    %v190 = vsel %vm16, %v187, 0
    %v193 = vsel %vm16, %v188, 0
    %195 = vmatprep.subr.mxu0 0.0
    %196 = vmatpush1.msra.mxu0 %v12
    %197 = vmatprep.subr.mxu0 0.0
    %198 = vmatpush1.msra.mxu0 %v25
    %199 = vmatprep.subr.mxu0 0.0
    %200 = vmatpush1.msra.mxu0 0.0
    %201 = vmatprep.subr.mxu0 0.0
    %202 = vmatpush1.msra.mxu0 0.0
    %203 = vmatprep.subr.mxu0 0.0
    %204 = vmatpush1.msra.mxu0 0.0
    %205 = vmatprep.subr.mxu0 0.0
    %206 = vmatpush1.msra.mxu0 0.0
    %207 = vmatprep.subr.mxu0 0.0
    %208 = vmatpush1.msra.mxu0 0.0
    %209 = vmatprep.subr.mxu0 0.0
    %210 = vmatpush1.msra.mxu0 0.0
    %211 = vmatprep.subr.mxu0 0.0
    %212 = vmatpush1.msra.mxu0 0.0
    %213 = vmatprep.subr.mxu0 0.0
    %214 = vmatpush1.msra.mxu0 0.0
    %215 = vmatprep.subr.mxu0 0.0
    %216 = vmatpush1.msra.mxu0 0.0
    %217 = vmatprep.subr.mxu0 0.0
    %218 = vmatpush1.msra.mxu0 0.0
    %219 = vmatprep.subr.mxu0 0.0
    %220 = vmatpush1.msra.mxu0 0.0
    %221 = vmatprep.subr.mxu0 0.0
    %222 = vmatpush1.msra.mxu0 0.0
    %223 = vmatprep.subr.mxu0 0.0
    %224 = vmatpush1.msra.mxu0 0.0
    %225 = vmatprep.subr.mxu0 0.0
    %226 = vmatpush1.msra.mxu0 0.0
    %227 = vmatprep.subr.mxu0 0.0
    %228 = vmatpush1.msra.mxu0 0.0
    %229 = vmatprep.subr.mxu0 0.0
    %230 = vmatpush1.msra.mxu0 0.0
    %231 = vmatprep.subr.mxu0 0.0
    %232 = vmatpush1.msra.mxu0 0.0
    %233 = vmatprep.subr.mxu0 0.0
    %234 = vmatpush1.msra.mxu0 0.0
    %235 = vmatprep.subr.mxu0 0.0
    %236 = vmatpush1.msra.mxu0 0.0
    %237 = vmatprep.subr.mxu0 0.0
    %238 = vmatpush1.msra.mxu0 0.0
    %239 = vmatprep.subr.mxu0 0.0
    %240 = vmatpush1.msra.mxu0 0.0
    %241 = vmatprep.subr.mxu0 0.0
    %242 = vmatpush1.msra.mxu0 0.0
    %243 = vmatprep.subr.mxu0 0.0
    %244 = vmatpush1.msra.mxu0 0.0
    %245 = vmatprep.subr.mxu0 0.0
    %246 = vmatpush1.msra.mxu0 0.0
    %247 = vmatprep.subr.mxu0 0.0
    %248 = vmatpush1.msra.mxu0 0.0
    %249 = vmatprep.subr.mxu0 0.0
    %250 = vmatpush1.msra.mxu0 0.0
    %251 = vmatprep.subr.mxu0 0.0
    %252 = vmatpush1.msra.mxu0 0.0
    %253 = vmatprep.subr.mxu0 0.0
    %254 = vmatpush1.msra.mxu0 0.0
    %255 = vmatprep.subr.mxu0 0.0
    %256 = vmatpush1.msra.mxu0 0.0
    %257 = vmatprep.subr.mxu0 0.0
    %258 = vmatpush1.msra.mxu0 0.0
    %259 = vmatprep.mubr.f32.mxu0 0.0
    %260 = vmatmul.mubr.f32.gmra.mrb[0].mxu0 %v190
    %v261 = vpop.f32.mrb[0].mxu0
    %v262 = vadd.f32 0.0, %v261
    %v263 = vpop.f32.mrb[0].mxu0
    %264 = vmatprep.mubr.f32.mxu0 0.0
    %265 = vmatmul.mubr.f32.gmra.mrb[0].mxu0 %v193
    %v266 = vpop.f32.mrb[0].mxu0
    %v267 = vadd.f32 0.0, %v266
    %v268 = vpop.f32.mrb[0].mxu0
    %269 = vdwg.mxu0
    %v271 = vsel %vm16, %v262, 0
    %v274 = vsel %vm16, %v267, 0
    %276 = vmatprep.subr.mxu0 0.0
    %277 = vmatpush1.xpose.msra.mxu0 %v190
    %278 = vmatprep.subr.mxu0 0.0
    %279 = vmatpush1.xpose.msra.mxu0 %v193
    %280 = vmatprep.subr.mxu0 0.0
    %281 = vmatpush1.xpose.msra.mxu0 0.0
    %282 = vmatprep.subr.mxu0 0.0
    %283 = vmatpush1.xpose.msra.mxu0 0.0
    %284 = vmatprep.subr.mxu0 0.0
    %285 = vmatpush1.xpose.msra.mxu0 0.0
    %286 = vmatprep.subr.mxu0 0.0
    %287 = vmatpush1.xpose.msra.mxu0 0.0
    %288 = vmatprep.subr.mxu0 0.0
    %289 = vmatpush1.xpose.msra.mxu0 0.0
    %290 = vmatprep.subr.mxu0 0.0
    %291 = vmatpush1.xpose.msra.mxu0 0.0
    %292 = vmatprep.subr.mxu0 0.0
    %293 = vmatpush1.xpose.msra.mxu0 0.0
    %294 = vmatprep.subr.mxu0 0.0
    %295 = vmatpush1.xpose.msra.mxu0 0.0
    %296 = vmatprep.subr.mxu0 0.0
    %297 = vmatpush1.xpose.msra.mxu0 0.0
    %298 = vmatprep.subr.mxu0 0.0
    %299 = vmatpush1.xpose.msra.mxu0 0.0
    %300 = vmatprep.subr.mxu0 0.0
    %301 = vmatpush1.xpose.msra.mxu0 0.0
    %302 = vmatprep.subr.mxu0 0.0
    %303 = vmatpush1.xpose.msra.mxu0 0.0
    %304 = vmatprep.subr.mxu0 0.0
    %305 = vmatpush1.xpose.msra.mxu0 0.0
    %306 = vmatprep.subr.mxu0 0.0
    %307 = vmatpush1.xpose.msra.mxu0 0.0
    %308 = vmatprep.subr.mxu0 0.0
    %309 = vmatpush1.xpose.msra.mxu0 0.0
    %310 = vmatprep.subr.mxu0 0.0
    %311 = vmatpush1.xpose.msra.mxu0 0.0
    %312 = vmatprep.subr.mxu0 0.0
    %313 = vmatpush1.xpose.msra.mxu0 0.0
    %314 = vmatprep.subr.mxu0 0.0
    %315 = vmatpush1.xpose.msra.mxu0 0.0
    %316 = vmatprep.subr.mxu0 0.0
    %317 = vmatpush1.xpose.msra.mxu0 0.0
    %318 = vmatprep.subr.mxu0 0.0
    %319 = vmatpush1.xpose.msra.mxu0 0.0
    %320 = vmatprep.subr.mxu0 0.0
    %321 = vmatpush1.xpose.msra.mxu0 0.0
    %322 = vmatprep.subr.mxu0 0.0
    %323 = vmatpush1.xpose.msra.mxu0 0.0
    %324 = vmatprep.subr.mxu0 0.0
    %325 = vmatpush1.xpose.msra.mxu0 0.0
    %326 = vmatprep.subr.mxu0 0.0
    %327 = vmatpush1.xpose.msra.mxu0 0.0
    %328 = vmatprep.subr.mxu0 0.0
    %329 = vmatpush1.xpose.msra.mxu0 0.0
    %330 = vmatprep.subr.mxu0 0.0
    %331 = vmatpush1.xpose.msra.mxu0 0.0
    %332 = vmatprep.subr.mxu0 0.0
    %333 = vmatpush1.xpose.msra.mxu0 0.0
    %334 = vmatprep.subr.mxu0 0.0
    %335 = vmatpush1.xpose.msra.mxu0 0.0
    %336 = vmatprep.subr.mxu0 0.0
    %337 = vmatpush1.xpose.msra.mxu0 0.0
    %338 = vmatprep.subr.mxu0 0.0
    %339 = vmatpush1.xpose.msra.mxu0 0.0
    %340 = vmatprep.mubr.f32.mxu0 0.0
    %341 = vmatmul.mubr.f32.gmra.mrb[0].mxu0 %v271
    %v342 = vpop.f32.mrb[0].mxu0
    %v343 = vadd.f32 0.0, %v342
    %v344 = vpop.f32.mrb[0].mxu0
    %345 = vmatprep.mubr.f32.mxu0 0.0
    %346 = vmatmul.mubr.f32.gmra.mrb[0].mxu0 %v274
    %v347 = vpop.f32.mrb[0].mxu0
    %v348 = vadd.f32 0.0, %v347
    %v349 = vpop.f32.mrb[0].mxu0
    %350 = vdwg.mxu0
    %s351 = scalar_lea.vmem [#allocation2], 16
    %352 = vst.msk [vmem:[%s351] sm:$0xff] %vm183, %v343
    %353 = vst.msk [vmem:[%s351 + $0x8] sm:$0xff] %vm183, %v348
    // Predicated region
    $region10: #{tpu_custom_call.1} parent=1 // pred_check
      _
    $region11: #{tpu_custom_call.1} parent=1 // pred_check_branch
      %355 = sbr.rel (0) target = $region13
    $region12: #{tpu_custom_call.1} parent=1 // pred_region
      %s357 = ssub.s32 512, 512
      %358 = vsyncadd [#allocation3], %s357
      %s359 = sshll.u32 [#allocation2], 4
      %s360 = int_to_ptr.vmem [resolvable:$true] %s359
      %365 = dma.vmem_to_hbm [thread:$0]  %s360, 512, %s2, [#allocation3], 128, 128, 8
    $region13: #{tpu_custom_call.1} parent=1 // pred_fallthru
      _
    // Predicated region
    $region14: #{tpu_custom_call.1} parent=1 // pred_check
      _
    $region15: #{tpu_custom_call.1} parent=1 // pred_check_branch
      %367 = sbr.rel (0) target = $region17
    $region16: #{tpu_custom_call.1} parent=1 // pred_region
      %368 = dma.done [#allocation3], 512
    $region17: #{tpu_custom_call.1} parent=1 // pred_fallthru
      _
    %369 = vsyncpa [#allocation3], 1

</llo_original>
